<compile_context>
chip_gen: v7x
topology: tpu7x:2x2x1
jax: 0.10.0
libtpu: 0.0.40
codegen_flags: <defaults>
</compile_context>

<pallas_src>
import functools

import jax
import jax.numpy as jnp
import numpy as np
from jax.experimental import pallas as pl
from jax.experimental.pallas import tpu as pltpu


def _round_up(x, m):
    return -(-x // m) * m


def _choose_tiles(lead, n, k_in, k_out, itemsize):
    """Pick (g, tn) = (#leading slices, #points) per grid step.

    VMEM accounting is lane/sublane-padding aware: the minor dims k_in/k_out
    (typically 4..36) occupy a full 128-lane row in VMEM, and each operand is
    double-buffered by the Pallas pipeline.
    """
    sub = 8 * max(1, 4 // itemsize)      # sublane quantum: 8 (i32) / 16 (i16) / 32 (i8)
    lane_bytes = (_round_up(k_in, 128) + _round_up(k_out, 128)) * itemsize
    per_row = 2 * lane_bytes             # x2: double buffering of in + out blocks
    budget = 8 * 1024 * 1024             # stays well under v5e's 16 MiB scoped default

    tn_cands = [t for t in range(sub, n + 1, sub) if n % t == 0] or [n]
    g_cands = [d for d in range(1, lead + 1) if lead % d == 0]

    def score(g, tn):
        rows = g * tn
        fits = rows * per_row <= budget
        steps = (lead // g) * (n // tn)
        # Priorities: fit the (padded) VMEM budget > give >= 4 grid steps
        # (2 per TensorCore on dual-core parts, keeps the DMA pipeline busy)
        # > biggest tile (amortizes the ~0.35 us per-step overhead).
        return (fits, steps >= 4, rows if fits else -rows)

    return max(((g, t) for g in g_cands for t in tn_cands),
               key=lambda c: score(*c))


def _dense_dilated_kernel(x_ref, o_ref, *, k_out, dilation, l_b):
    # x_ref: (g, tn, K_in) ; o_ref: (g, tn, k_out)   (points on sublanes, K on lanes)
    g, tn, _ = o_ref.shape
    # Global point index of every row in this block (offset by the N-block id,
    # so N-tiling stays correct).
    n0 = pl.program_id(1) * tn
    point = n0 + jax.lax.broadcasted_iota(jnp.int32, (g, tn, 1), 1)
    use_dilated = point >= l_b                                   # (g, tn, 1)

    # First-k pick: one contiguous slice of the input tile.
    firstk = x_ref[:, :, :k_out]                                 # (g, tn, k_out)
    # Dilated pick: k_out static unit slices (column j*dilation), concatenated
    # once.  (k_out-1)*dilation < K_in always holds for k_out = ceil(K_in/d).
    cols = [x_ref[:, :, j * dilation:j * dilation + 1] for j in range(k_out)]
    dilated = jnp.concatenate(cols, axis=2) if k_out > 1 else cols[0]

    # Single select + single whole-tile store.
    o_ref[...] = jnp.where(use_dilated, dilated, firstk)


def dense_dilated(edge_index, *, k=9, dilation=1, l_b=90):
    """Functional equivalent of DenseDilated.forward.

    edge_index: (2, B, N, K_in) integer array with ceil(K_in / dilation) == k.
    Returns:    (2, B, N, k) array of the same dtype.
    """
    two, b, n, k_in = edge_index.shape
    k_out = -(-k_in // dilation)   # ceil; (k_out - 1) * dilation < k_in
    assert k_out == k, "DenseDilated requires ceil(K_in / dilation) == k"

    # Fast paths: no kernel / no extra HBM traffic needed.
    if dilation == 1 or l_b >= n:
        return edge_index[..., :k_out]
    if l_b <= 0:
        return edge_index[..., ::dilation]

    lead = two * b
    x = edge_index.reshape(lead, n, k_in)      # free: merges leading dims only

    itemsize = jnp.dtype(edge_index.dtype).itemsize
    g, tn = _choose_tiles(lead, n, k_in, k_out, itemsize)

    out = pl.pallas_call(
        functools.partial(_dense_dilated_kernel, k_out=k_out,
                          dilation=dilation, l_b=l_b),
        out_shape=jax.ShapeDtypeStruct((lead, n, k_out), edge_index.dtype),
        grid=(lead // g, n // tn),
        in_specs=[pl.BlockSpec((g, tn, k_in), lambda i, j: (i, j, 0))],
        out_specs=pl.BlockSpec((g, tn, k_out), lambda i, j: (i, j, 0)),
        compiler_params=pltpu.CompilerParams(
            dimension_semantics=("parallel", "parallel")),
        cost_estimate=pl.CostEstimate(
            flops=0, transcendentals=0,
            bytes_accessed=lead * n * (k_in + k_out) * itemsize),
    )(x)

    return out.reshape(two, b, n, k_out)       # free: splits leading dim only


def _reference(edge_index, *, k, dilation, l_b):
    # Pure-JAX functional reference of the intended PyTorch semantics.
    dilated = edge_index[:, :, :, ::dilation]
    firstk = edge_index[:, :, :, :k]
    n = edge_index.shape[2]
    pidx = jnp.arange(n)[None, None, :, None]
    return jnp.where(pidx < l_b, firstk, dilated)


if __name__ == "__main__":
    key = jax.random.PRNGKey(0)
    l_b = 90

    # Main config: kernel path (dilation > 1), both mask branches exercised.
    B, N, k, dilation = 2, 128, 4, 2
    K_in = k * dilation                     # KNN upstream produces k*dilation candidates
    edge_index = jax.random.randint(key, (2, B, N, K_in), 0, N, dtype=jnp.int32)
    out = jax.block_until_ready(dense_dilated(edge_index, k=k, dilation=dilation, l_b=l_b))
    ref = _reference(edge_index, k=k, dilation=dilation, l_b=l_b)
    np.testing.assert_array_equal(np.asarray(out), np.asarray(ref))
    assert out.shape == (2, B, N, k) and out.dtype == edge_index.dtype

    # N-tiled config (tn < N): checks the in-kernel point-index block offset.
    B2, N2, k2, d2 = 1, 256, 3, 3
    ei2 = jax.random.randint(key, (2, B2, N2, k2 * d2), 0, N2, dtype=jnp.int32)
    out2 = jax.block_until_ready(dense_dilated(ei2, k=k2, dilation=d2, l_b=l_b))
    np.testing.assert_array_equal(
        np.asarray(out2), np.asarray(_reference(ei2, k=k2, dilation=d2, l_b=l_b)))

    # K_in not a multiple of dilation (ceil semantics of ::dilation).
    ei3 = jax.random.randint(key, (2, 1, 96, 7), 0, 96, dtype=jnp.int32)
    out3 = jax.block_until_ready(dense_dilated(ei3, k=4, dilation=2, l_b=l_b))
    np.testing.assert_array_equal(
        np.asarray(out3), np.asarray(_reference(ei3, k=4, dilation=2, l_b=l_b)))

    # dilation == 1 fast path (common gcn_lib config): pure slice, no kernel.
    ei1 = jax.random.randint(key, (2, B, N, k), 0, N, dtype=jnp.int32)
    out1 = jax.block_until_ready(dense_dilated(ei1, k=k, dilation=1, l_b=l_b))
    np.testing.assert_array_equal(
        np.asarray(out1), np.asarray(_reference(ei1, k=k, dilation=1, l_b=l_b)))

    print("KERNEL_OK")
</pallas_src>

<mosaic_0001>
module attributes {stable_mosaic.version = 11 : i64} {
  func.func @_dense_dilated_kernel(%arg0: i32, %arg1: i32, %arg2: memref<1x128x8xi32, #tpu.memory_space<vmem>>, %arg3: memref<1x128x4xi32, #tpu.memory_space<vmem>>) attributes {dimension_semantics = [#tpu.dimension_semantics<parallel>, #tpu.dimension_semantics<parallel>], iteration_bounds = array<i64: 4, 1>, scalar_prefetch = 0 : i64, scratch_operands = 0 : i64, tpu.core_type = #tpu.core_type<tc>, window_params = [{transform_indices = @transform_0, window_bounds = array<i64: 1, 128, 8>}, {transform_indices = @transform_1, window_bounds = array<i64: 1, 128, 4>}]} {
    %c128_i32 = arith.constant 128 : i32
    %0 = arith.muli %arg1, %c128_i32 : i32
    %1 = tpu.iota {dimensions = array<i32: 1>} : vector<1x128x1xi32>
    %2 = vector.broadcast %0 : i32 to vector<1x128x1xi32>
    %3 = arith.addi %2, %1 : vector<1x128x1xi32>
    %c90_i32 = arith.constant 90 : i32
    %4 = vector.broadcast %c90_i32 : i32 to vector<1x128x1xi32>
    %5 = arith.cmpi sge, %3, %4 : vector<1x128x1xi32>
    %c0 = arith.constant 0 : index
    %c0_0 = arith.constant 0 : index
    %c0_1 = arith.constant 0 : index
    %6 = vector.load %arg2[%c0, %c0_0, %c0_1] : memref<1x128x8xi32, #tpu.memory_space<vmem>>, vector<1x128x4xi32>
    %c0_2 = arith.constant 0 : index
    %c0_3 = arith.constant 0 : index
    %c0_4 = arith.constant 0 : index
    %7 = vector.load %arg2[%c0_2, %c0_3, %c0_4] : memref<1x128x8xi32, #tpu.memory_space<vmem>>, vector<1x128x1xi32>
    %c0_5 = arith.constant 0 : index
    %c0_6 = arith.constant 0 : index
    %c2 = arith.constant 2 : index
    %8 = vector.load %arg2[%c0_5, %c0_6, %c2] : memref<1x128x8xi32, #tpu.memory_space<vmem>>, vector<1x128x1xi32>
    %c0_7 = arith.constant 0 : index
    %c0_8 = arith.constant 0 : index
    %c4 = arith.constant 4 : index
    %9 = vector.load %arg2[%c0_7, %c0_8, %c4] : memref<1x128x8xi32, #tpu.memory_space<vmem>>, vector<1x128x1xi32>
    %c0_9 = arith.constant 0 : index
    %c0_10 = arith.constant 0 : index
    %c6 = arith.constant 6 : index
    %10 = vector.load %arg2[%c0_9, %c0_10, %c6] : memref<1x128x8xi32, #tpu.memory_space<vmem>>, vector<1x128x1xi32>
    %11 = tpu.concatenate %7, %8, %9, %10 in 2 : vector<1x128x1xi32>, vector<1x128x1xi32>, vector<1x128x1xi32>, vector<1x128x1xi32> -> vector<1x128x4xi32>
    %12 = vector.shape_cast %5 : vector<1x128x1xi1> to vector<1x128x1xi1>
    %13 = vector.broadcast %12 : vector<1x128x1xi1> to vector<1x128x4xi1>
    %14 = arith.select %13, %11, %6 : vector<1x128x4xi1>, vector<1x128x4xi32>
    %c0_11 = arith.constant 0 : index
    %c0_12 = arith.constant 0 : index
    %c0_13 = arith.constant 0 : index
    %15 = vector.load %arg3[%c0_11, %c0_12, %c0_13] : memref<1x128x4xi32, #tpu.memory_space<vmem>>, vector<1x128x4xi32>
    tpu.vector_store %arg3[%c0_11, %c0_12, %c0_13], %14 {strides = array<i32>} : memref<1x128x4xi32, #tpu.memory_space<vmem>>, vector<1x128x4xi32>,
    return
  }
  func.func @transform_0(%arg0: i32, %arg1: i32) -> (i32, i32, i32) {
    %c0_i32 = arith.constant 0 : i32
    %c0_i32_0 = arith.constant 0 : i32
    return %arg0, %arg1, %c0_i32 : i32, i32, i32
  }
  func.func @transform_1(%arg0: i32, %arg1: i32) -> (i32, i32, i32) {
    %c0_i32 = arith.constant 0 : i32
    %c0_i32_0 = arith.constant 0 : i32
    return %arg0, %arg1, %c0_i32 : i32, i32, i32
  }
}

</mosaic_0001>

<llo_original>
// kernel: tpu_custom_call.1
$region0: #{tpu_custom_call.1}
  #allocation0 [shape = 'u32[]', space=smem, size = 0x4, offset = 0x4, fixed_abs, tag = 'smem constant byte address 0x4 - core index']
  #allocation1 [shape = 'u32[144,128]{1,0:T(1,128)}', space=vmem, size = 0x12000, scoped, tag = 'internal scratch']
  %s0 = inlined_call_operand.vmem [shape: s32[4,128,8], index: 0, kind: input, shape index: {}]
  %s1 = inlined_call_operand.vmem [shape: s32[4,128,4], index: 1, kind: output, shape index: {}]
  %s2 = sld [smem:[#allocation0]]
  $region37: #{tpu_custom_call.1} parent=0
    _
  %s4 = ssub.s32 1, %s2
  %s5 = scalar_select 0, %s4, %s2
  loop: start=0, step=1, limit=6
  $region2: #{tpu_custom_call.1} parent=0 // loop_pre_header
    _
  $region3: #{tpu_custom_call.1} parent=0 // loop_header
    %s7 = sphi 0, %s11
    %p8 = scmp.ge.s32.totalorder %s7, 6
    %s14 = sphi 0, %s26
    %s15 = sphi 0, %s22
    %s16 = sphi 0, %s14
    %s17 = sphi 0, %s15
    %s18 = sphi 0, %s16
    %s19 = sphi 0, %s17
    %s31 = sphi 0, %s33
    %s34 = sphi 0, %s31
    %s35 = sphi 0, %s34
    %s51 = sphi 0, %s35
    %s59 = sphi 0, %s61
    %s62 = sphi 0, %s59
    %s63 = sphi 0, %s62
    %s79 = sphi 0, %s63
  $region4: #{tpu_custom_call.1} parent=0 // loop_header_branch
    %10 = sbr.rel (%p8) target = $region8
  $region5: #{tpu_custom_call.1} parent=0 // loop_body
    %s12 = ssub.s32 %s7, 1
    %s13 = ssub.s32 %s7, 2
    %s20 = sadd.s32 1, %s15
    %p21 = scmp.ge.s32.totalorder %s20, 1
    %s22 = scalar_select %p21, 0, %s20
    %s23 = sadd.s32 1, %s14
    %s24 = scalar_select %p21, %s23, %s14
    %p25 = scmp.ge.s32.totalorder %s24, 4
    %s26 = scalar_select %p25, 0, %s24
    %s27 = ssub.s32 %s14, %s26
    %s28 = ssub.s32 %s15, %s22
    %s29 = sor.u32 %s27, %s28
    %p30 = scmp.eq.s32.totalorder %s29, 0
    %s32 = sadd.s32 %s31, 1
    %s33 = scalar_select %p30, %s31, %s32
    %p36 = pneg %p30
    %p37 = scmp.eq.s32.totalorder %s7, 3
    %p38 = por %p36, %p37
    %p39 = scmp.ne.s32.totalorder %s31, %s34
    %p40 = scmp.eq.s32.totalorder %s7, 0
    %p41 = por %p39, %p40
    %p42 = scmp.ne.s32.totalorder %s31, %s34
    %p43 = scmp.eq.s32.totalorder %s12, 3
    %p44 = por %p42, %p43
    %p45 = scmp.ne.s32.totalorder %s34, %s35
    %p46 = scmp.eq.s32.totalorder %s12, 0
    %p47 = por %p45, %p46
    %p48 = scmp.ne.s32.totalorder %s34, %s35
    %p49 = scmp.eq.s32.totalorder %s13, 3
    %p50 = por %p48, %p49
    %p52 = scmp.ne.s32.totalorder %s35, %s51
    %p53 = scmp.eq.s32.totalorder %s13, 0
    %p54 = por %p52, %p53
    %s55 = ssub.s32 %s14, %s26
    %s56 = ssub.s32 %s15, %s22
    %s57 = sor.u32 %s55, %s56
    %p58 = scmp.eq.s32.totalorder %s57, 0
    %s60 = sadd.s32 %s59, 1
    %s61 = scalar_select %p58, %s59, %s60
    %p64 = pneg %p58
    %p65 = scmp.eq.s32.totalorder %s7, 3
    %p66 = por %p64, %p65
    %p67 = scmp.ne.s32.totalorder %s59, %s62
    %p68 = scmp.eq.s32.totalorder %s7, 0
    %p69 = por %p67, %p68
    %p70 = scmp.ne.s32.totalorder %s59, %s62
    %p71 = scmp.eq.s32.totalorder %s12, 3
    %p72 = por %p70, %p71
    %p73 = scmp.ne.s32.totalorder %s62, %s63
    %p74 = scmp.eq.s32.totalorder %s12, 0
    %p75 = por %p73, %p74
    %p76 = scmp.ne.s32.totalorder %s62, %s63
    %p77 = scmp.eq.s32.totalorder %s13, 3
    %p78 = por %p76, %p77
    %p80 = scmp.ne.s32.totalorder %s63, %s79
    %p81 = scmp.eq.s32.totalorder %s13, 0
    %p82 = por %p80, %p81
    %p83 = scmp.le.s32.totalorder 1, %s7
    %p84 = scmp.lt.s32.totalorder %s7, 5
    %p85 = pnand %p83, %p84
    %p86 = pneg %p85
    // Predicated region
    $region9: #{tpu_custom_call.1} parent=5 // pred_check
      _
    $region10: #{tpu_custom_call.1} parent=5 // pred_check_branch
      %88 = sbr.rel (%p85) target = $region12
    $region11: #{tpu_custom_call.1} parent=5 // pred_region
      %s89 = ssub.s32 %s7, 1
    $region12: #{tpu_custom_call.1} parent=5 // pred_fallthru
      _
    %p90 = scmp.lt.s32.totalorder %s7, 4
    // Predicated region
    $region13: #{tpu_custom_call.1} parent=5 // pred_check
      %p91 = pneg %p90
    $region14: #{tpu_custom_call.1} parent=5 // pred_check_branch
      %93 = sbr.rel (%p91) target = $region16
    $region15: #{tpu_custom_call.1} parent=5 // pred_region
      // Predicated region
      $region17: #{tpu_custom_call.1} parent=15 // pred_check
        %p94 = pneg %p41
      $region18: #{tpu_custom_call.1} parent=15 // pred_check_branch
        %96 = sbr.rel (%p94) target = $region20
      $region19: #{tpu_custom_call.1} parent=15 // pred_region
        %s97 = smul.u32 16, %s15
        %p98 = scmp.lt.s32.totalorder %s14, 3
        %s99 = scalar_select %p98, %s14, 3
        %p100 = scmp.lt.s32.totalorder %s97, 15
        %s101 = scalar_select %p100, %s97, 15
        %s102 = smul.addr %s99, 16
        %s103 = sadd.s32 %s101, %s102
        %s104 = smul.addr %s103, 8
        %s105 = scalar_lea.vmem %s0, %s104
        %s106 = smul.u32 16, %s15
      $region20: #{tpu_custom_call.1} parent=15 // pred_fallthru
        _
    $region16: #{tpu_custom_call.1} parent=5 // pred_fallthru
      _
    %p107 = scmp.le.s32.totalorder 1, %s7
    %p108 = scmp.lt.s32.totalorder %s7, 5
    %p109 = pnand %p107, %p108
    %p110 = pneg %p109
    // Predicated region
    $region21: #{tpu_custom_call.1} parent=5 // pred_check
      _
    $region22: #{tpu_custom_call.1} parent=5 // pred_check_branch
      %112 = sbr.rel (%p109) target = $region24
    $region23: #{tpu_custom_call.1} parent=5 // pred_region
      %s113 = ssub.s32 %s7, 1
      %s114 = smul.u32 16, %s17
      %p115 = scmp.lt.s32.totalorder %s16, 3
      %s116 = scalar_select %p115, %s16, 3
      %p117 = scmp.lt.s32.totalorder %s114, 15
      %s118 = scalar_select %p117, %s114, 15
      %s119 = smul.addr %s116, 16
      %s120 = sadd.s32 %s118, %s119
      %s121 = smul.addr %s120, 8
      %s122 = scalar_lea.vmem %s0, %s121
      %p123 = pneg %p47
      %p124 = pneg %p44
      %p125 = pneg %p75
      %p126 = pneg %p72
      %s127 = smul.u32 16, %s17
      %p128 = scmp.lt.s32.totalorder %s16, 3
      %s129 = scalar_select %p128, %s16, 3
      %p130 = scmp.lt.s32.totalorder %s127, 15
      %s131 = scalar_select %p130, %s127, 15
      %s132 = smul.addr %s129, 16
      %s133 = sadd.s32 %s131, %s132
      %s134 = smul.addr %s133, 8
      %s135 = scalar_lea.vmem %s1, %s134
      %s136 = smul.u32 16, %s17
      %p137 = scmp.lt.s32.totalorder %s16, 3
      %s138 = scalar_select %p137, %s16, 3
      %p139 = scmp.lt.s32.totalorder %s136, 15
      %s140 = scalar_select %p139, %s136, 15
      %s141 = smul.addr %s138, 16
      %s142 = sadd.s32 %s140, %s141
      %s143 = smul.addr %s142, 8
      %s144 = scalar_lea.vmem %s0, %s143
      %s145 = smul.u32 16, %s17
      %s146 = smul.u32 16, %s17
      %p147 = scmp.lt.s32.totalorder %s16, 3
      %s148 = scalar_select %p147, %s16, 3
      %p149 = scmp.lt.s32.totalorder %s146, 15
      %s150 = scalar_select %p149, %s146, 15
      %s151 = smul.addr %s148, 16
      %s152 = sadd.s32 %s150, %s151
      %s153 = smul.addr %s152, 8
      %s154 = scalar_lea.vmem %s1, %s153
      %s155 = smul.u32 16, %s17
      %s156 = smul.u32 %s17, 128
      %v157 = vlaneseq
      %v158 = vshrl.u32 %v157, 7
      %v159 = vadd.s32 %v158, 8
      %v160 = vadd.s32 %v158, 16
      %v161 = vadd.s32 %v158, 24
      %v162 = vadd.s32 %v158, 32
      %v163 = vadd.s32 %v158, 40
      %v164 = vadd.s32 %v158, 48
      %v165 = vadd.s32 %v158, 56
      %v166 = vadd.s32 %v158, 64
      %v167 = vadd.s32 %v158, 72
      %v168 = vadd.s32 %v158, 80
      %v169 = vadd.s32 %v158, 88
      %v170 = vadd.s32 %v158, 96
      %v171 = vadd.s32 %v158, 104
      %v172 = vadd.s32 %v158, 112
      %v173 = vadd.s32 %v158, 120
      %v174 = vstv %s156
      %v175 = vadd.s32 %v174, %v158
      %v176 = vadd.s32 %v174, %v159
      %v177 = vadd.s32 %v174, %v160
      %v178 = vadd.s32 %v174, %v161
      %v179 = vadd.s32 %v174, %v162
      %v180 = vadd.s32 %v174, %v163
      %v181 = vadd.s32 %v174, %v164
      %v182 = vadd.s32 %v174, %v165
      %v183 = vadd.s32 %v174, %v166
      %v184 = vadd.s32 %v174, %v167
      %v185 = vadd.s32 %v174, %v168
      %v186 = vadd.s32 %v174, %v169
      %v187 = vadd.s32 %v174, %v170
      %v188 = vadd.s32 %v174, %v171
      %v189 = vadd.s32 %v174, %v172
      %v190 = vadd.s32 %v174, %v173
      %vm191 = vcmp.ge.s32.totalorder %v175, 90
      %vm192 = vcmp.ge.s32.totalorder %v176, 90
      %vm193 = vcmp.ge.s32.totalorder %v177, 90
      %vm194 = vcmp.ge.s32.totalorder %v178, 90
      %vm195 = vcmp.ge.s32.totalorder %v179, 90
      %vm196 = vcmp.ge.s32.totalorder %v180, 90
      %vm197 = vcmp.ge.s32.totalorder %v181, 90
      %vm198 = vcmp.ge.s32.totalorder %v182, 90
      %vm199 = vcmp.ge.s32.totalorder %v183, 90
      %vm200 = vcmp.ge.s32.totalorder %v184, 90
      %vm201 = vcmp.ge.s32.totalorder %v185, 90
      %vm202 = vcmp.ge.s32.totalorder %v186, 90
      %vm203 = vcmp.ge.s32.totalorder %v187, 90
      %vm204 = vcmp.ge.s32.totalorder %v188, 90
      %vm205 = vcmp.ge.s32.totalorder %v189, 90
      %vm206 = vcmp.ge.s32.totalorder %v190, 90
      %v207 = vld [vmem:[%s144] sm:$0xff]
      %v208 = vld [vmem:[%s144 + $0x8] sm:$0xff]
      %v209 = vld [vmem:[%s144 + $0x10] sm:$0xff]
      %v210 = vld [vmem:[%s144 + $0x18] sm:$0xff]
      %v211 = vld [vmem:[%s144 + $0x20] sm:$0xff]
      %v212 = vld [vmem:[%s144 + $0x28] sm:$0xff]
      %v213 = vld [vmem:[%s144 + $0x30] sm:$0xff]
      %v214 = vld [vmem:[%s144 + $0x38] sm:$0xff]
      %v215 = vld [vmem:[%s144 + $0x40] sm:$0xff]
      %v216 = vld [vmem:[%s144 + $0x48] sm:$0xff]
      %v217 = vld [vmem:[%s144 + $0x50] sm:$0xff]
      %v218 = vld [vmem:[%s144 + $0x58] sm:$0xff]
      %v219 = vld [vmem:[%s144 + $0x60] sm:$0xff]
      %v220 = vld [vmem:[%s144 + $0x68] sm:$0xff]
      %v221 = vld [vmem:[%s144 + $0x70] sm:$0xff]
      %v222 = vld [vmem:[%s144 + $0x78] sm:$0xff]
      %223 = vrot.lane.b32.xlu0 %v207, 127
      %v224 = vpop.permute.xlu0 %223
      %225 = vrot.lane.b32.xlu0 %v208, 127
      %v226 = vpop.permute.xlu0 %225
      %227 = vrot.lane.b32.xlu0 %v209, 127
      %v228 = vpop.permute.xlu0 %227
      %229 = vrot.lane.b32.xlu0 %v210, 127
      %v230 = vpop.permute.xlu0 %229
      %231 = vrot.lane.b32.xlu0 %v211, 127
      %v232 = vpop.permute.xlu0 %231
      %233 = vrot.lane.b32.xlu0 %v212, 127
      %v234 = vpop.permute.xlu0 %233
      %235 = vrot.lane.b32.xlu0 %v213, 127
      %v236 = vpop.permute.xlu0 %235
      %237 = vrot.lane.b32.xlu0 %v214, 127
      %v238 = vpop.permute.xlu0 %237
      %239 = vrot.lane.b32.xlu0 %v215, 127
      %v240 = vpop.permute.xlu0 %239
      %241 = vrot.lane.b32.xlu0 %v216, 127
      %v242 = vpop.permute.xlu0 %241
      %243 = vrot.lane.b32.xlu0 %v217, 127
      %v244 = vpop.permute.xlu0 %243
      %245 = vrot.lane.b32.xlu0 %v218, 127
      %v246 = vpop.permute.xlu0 %245
      %247 = vrot.lane.b32.xlu0 %v219, 127
      %v248 = vpop.permute.xlu0 %247
      %249 = vrot.lane.b32.xlu0 %v220, 127
      %v250 = vpop.permute.xlu0 %249
      %251 = vrot.lane.b32.xlu0 %v221, 127
      %v252 = vpop.permute.xlu0 %251
      %253 = vrot.lane.b32.xlu0 %v222, 127
      %v254 = vpop.permute.xlu0 %253
      %255 = vrot.lane.b32.xlu0 %v207, 126
      %v256 = vpop.permute.xlu0 %255
      %257 = vrot.lane.b32.xlu0 %v208, 126
      %v258 = vpop.permute.xlu0 %257
      %259 = vrot.lane.b32.xlu0 %v209, 126
      %v260 = vpop.permute.xlu0 %259
      %261 = vrot.lane.b32.xlu0 %v210, 126
      %v262 = vpop.permute.xlu0 %261
      %263 = vrot.lane.b32.xlu0 %v211, 126
      %v264 = vpop.permute.xlu0 %263
      %265 = vrot.lane.b32.xlu0 %v212, 126
      %v266 = vpop.permute.xlu0 %265
      %267 = vrot.lane.b32.xlu0 %v213, 126
      %v268 = vpop.permute.xlu0 %267
      %269 = vrot.lane.b32.xlu0 %v214, 126
      %v270 = vpop.permute.xlu0 %269
      %271 = vrot.lane.b32.xlu0 %v215, 126
      %v272 = vpop.permute.xlu0 %271
      %273 = vrot.lane.b32.xlu0 %v216, 126
      %v274 = vpop.permute.xlu0 %273
      %275 = vrot.lane.b32.xlu0 %v217, 126
      %v276 = vpop.permute.xlu0 %275
      %277 = vrot.lane.b32.xlu0 %v218, 126
      %v278 = vpop.permute.xlu0 %277
      %279 = vrot.lane.b32.xlu0 %v219, 126
      %v280 = vpop.permute.xlu0 %279
      %281 = vrot.lane.b32.xlu0 %v220, 126
      %v282 = vpop.permute.xlu0 %281
      %283 = vrot.lane.b32.xlu0 %v221, 126
      %v284 = vpop.permute.xlu0 %283
      %285 = vrot.lane.b32.xlu0 %v222, 126
      %v286 = vpop.permute.xlu0 %285
      %287 = vrot.lane.b32.xlu0 %v207, 125
      %v288 = vpop.permute.xlu0 %287
      %289 = vrot.lane.b32.xlu0 %v208, 125
      %v290 = vpop.permute.xlu0 %289
      %291 = vrot.lane.b32.xlu0 %v209, 125
      %v292 = vpop.permute.xlu0 %291
      %293 = vrot.lane.b32.xlu0 %v210, 125
      %v294 = vpop.permute.xlu0 %293
      %295 = vrot.lane.b32.xlu0 %v211, 125
      %v296 = vpop.permute.xlu0 %295
      %297 = vrot.lane.b32.xlu0 %v212, 125
      %v298 = vpop.permute.xlu0 %297
      %299 = vrot.lane.b32.xlu0 %v213, 125
      %v300 = vpop.permute.xlu0 %299
      %301 = vrot.lane.b32.xlu0 %v214, 125
      %v302 = vpop.permute.xlu0 %301
      %303 = vrot.lane.b32.xlu0 %v215, 125
      %v304 = vpop.permute.xlu0 %303
      %305 = vrot.lane.b32.xlu0 %v216, 125
      %v306 = vpop.permute.xlu0 %305
      %307 = vrot.lane.b32.xlu0 %v217, 125
      %v308 = vpop.permute.xlu0 %307
      %309 = vrot.lane.b32.xlu0 %v218, 125
      %v310 = vpop.permute.xlu0 %309
      %311 = vrot.lane.b32.xlu0 %v219, 125
      %v312 = vpop.permute.xlu0 %311
      %313 = vrot.lane.b32.xlu0 %v220, 125
      %v314 = vpop.permute.xlu0 %313
      %315 = vrot.lane.b32.xlu0 %v221, 125
      %v316 = vpop.permute.xlu0 %315
      %317 = vrot.lane.b32.xlu0 %v222, 125
      %v318 = vpop.permute.xlu0 %317
      %vm319 = vcmask 7168
      %v320 = vsel %vm319, %v207, %v224
      %v321 = vsel %vm319, %v208, %v226
      %v322 = vsel %vm319, %v209, %v228
      %v323 = vsel %vm319, %v210, %v230
      %v324 = vsel %vm319, %v211, %v232
      %v325 = vsel %vm319, %v212, %v234
      %v326 = vsel %vm319, %v213, %v236
      %v327 = vsel %vm319, %v214, %v238
      %v328 = vsel %vm319, %v215, %v240
      %v329 = vsel %vm319, %v216, %v242
      %v330 = vsel %vm319, %v217, %v244
      %v331 = vsel %vm319, %v218, %v246
      %v332 = vsel %vm319, %v219, %v248
      %v333 = vsel %vm319, %v220, %v250
      %v334 = vsel %vm319, %v221, %v252
      %v335 = vsel %vm319, %v222, %v254
      %vm336 = vcmask 15360
      %v337 = vsel %vm336, %v320, %v256
      %v338 = vsel %vm336, %v321, %v258
      %v339 = vsel %vm336, %v322, %v260
      %v340 = vsel %vm336, %v323, %v262
      %v341 = vsel %vm336, %v324, %v264
      %v342 = vsel %vm336, %v325, %v266
      %v343 = vsel %vm336, %v326, %v268
      %v344 = vsel %vm336, %v327, %v270
      %v345 = vsel %vm336, %v328, %v272
      %v346 = vsel %vm336, %v329, %v274
      %v347 = vsel %vm336, %v330, %v276
      %v348 = vsel %vm336, %v331, %v278
      %v349 = vsel %vm336, %v332, %v280
      %v350 = vsel %vm336, %v333, %v282
      %v351 = vsel %vm336, %v334, %v284
      %v352 = vsel %vm336, %v335, %v286
      %vm353 = vcmask 23552
      %v354 = vsel %vm353, %v337, %v288
      %v355 = vsel %vm353, %v338, %v290
      %v356 = vsel %vm353, %v339, %v292
      %v357 = vsel %vm353, %v340, %v294
      %v358 = vsel %vm353, %v341, %v296
      %v359 = vsel %vm353, %v342, %v298
      %v360 = vsel %vm353, %v343, %v300
      %v361 = vsel %vm353, %v344, %v302
      %v362 = vsel %vm353, %v345, %v304
      %v363 = vsel %vm353, %v346, %v306
      %v364 = vsel %vm353, %v347, %v308
      %v365 = vsel %vm353, %v348, %v310
      %v366 = vsel %vm353, %v349, %v312
      %v367 = vsel %vm353, %v350, %v314
      %v368 = vsel %vm353, %v351, %v316
      %v369 = vsel %vm353, %v352, %v318
      %v370 = vsel %vm191, 1, 0
      %v371 = vsel %vm192, 1, 0
      %v372 = vsel %vm193, 1, 0
      %v373 = vsel %vm194, 1, 0
      %v374 = vsel %vm195, 1, 0
      %v375 = vsel %vm196, 1, 0
      %v376 = vsel %vm197, 1, 0
      %v377 = vsel %vm198, 1, 0
      %v378 = vsel %vm199, 1, 0
      %v379 = vsel %vm200, 1, 0
      %v380 = vsel %vm201, 1, 0
      %v381 = vsel %vm202, 1, 0
      %v382 = vsel %vm203, 1, 0
      %v383 = vsel %vm204, 1, 0
      %v384 = vsel %vm205, 1, 0
      %v385 = vsel %vm206, 1, 0
      %vm386 = vcmp.eq.s32.totalorder %v370, 1
      %vm387 = vcmp.eq.s32.totalorder %v371, 1
      %vm388 = vcmp.eq.s32.totalorder %v372, 1
      %vm389 = vcmp.eq.s32.totalorder %v373, 1
      %vm390 = vcmp.eq.s32.totalorder %v374, 1
      %vm391 = vcmp.eq.s32.totalorder %v375, 1
      %vm392 = vcmp.eq.s32.totalorder %v376, 1
      %vm393 = vcmp.eq.s32.totalorder %v377, 1
      %vm394 = vcmp.eq.s32.totalorder %v378, 1
      %vm395 = vcmp.eq.s32.totalorder %v379, 1
      %vm396 = vcmp.eq.s32.totalorder %v380, 1
      %vm397 = vcmp.eq.s32.totalorder %v381, 1
      %vm398 = vcmp.eq.s32.totalorder %v382, 1
      %vm399 = vcmp.eq.s32.totalorder %v383, 1
      %vm400 = vcmp.eq.s32.totalorder %v384, 1
      %vm401 = vcmp.eq.s32.totalorder %v385, 1
      %v402 = vsel %vm386, %v354, %v207
      %v403 = vsel %vm387, %v355, %v208
      %v404 = vsel %vm388, %v356, %v209
      %v405 = vsel %vm389, %v357, %v210
      %v406 = vsel %vm390, %v358, %v211
      %v407 = vsel %vm391, %v359, %v212
      %v408 = vsel %vm392, %v360, %v213
      %v409 = vsel %vm393, %v361, %v214
      %v410 = vsel %vm394, %v362, %v215
      %v411 = vsel %vm395, %v363, %v216
      %v412 = vsel %vm396, %v364, %v217
      %v413 = vsel %vm397, %v365, %v218
      %v414 = vsel %vm398, %v366, %v219
      %v415 = vsel %vm399, %v367, %v220
      %v416 = vsel %vm400, %v368, %v221
      %v417 = vsel %vm401, %v369, %v222
      %vm418 = vcmask 31744
      %419 = vst.msk [vmem:[%s154] sm:$0xff] %vm418, %v402
      %420 = vst.msk [vmem:[%s154 + $0x8] sm:$0xff] %vm418, %v403
      %421 = vst.msk [vmem:[%s154 + $0x10] sm:$0xff] %vm418, %v404
      %422 = vst.msk [vmem:[%s154 + $0x18] sm:$0xff] %vm418, %v405
      %423 = vst.msk [vmem:[%s154 + $0x20] sm:$0xff] %vm418, %v406
      %424 = vst.msk [vmem:[%s154 + $0x28] sm:$0xff] %vm418, %v407
      %425 = vst.msk [vmem:[%s154 + $0x30] sm:$0xff] %vm418, %v408
      %426 = vst.msk [vmem:[%s154 + $0x38] sm:$0xff] %vm418, %v409
      %427 = vst.msk [vmem:[%s154 + $0x40] sm:$0xff] %vm418, %v410
      %428 = vst.msk [vmem:[%s154 + $0x48] sm:$0xff] %vm418, %v411
      %429 = vst.msk [vmem:[%s154 + $0x50] sm:$0xff] %vm418, %v412
      %430 = vst.msk [vmem:[%s154 + $0x58] sm:$0xff] %vm418, %v413
      %431 = vst.msk [vmem:[%s154 + $0x60] sm:$0xff] %vm418, %v414
      %432 = vst.msk [vmem:[%s154 + $0x68] sm:$0xff] %vm418, %v415
      %433 = vst.msk [vmem:[%s154 + $0x70] sm:$0xff] %vm418, %v416
      %434 = vst.msk [vmem:[%s154 + $0x78] sm:$0xff] %vm418, %v417
      %s435 = smul.u32 16, %s17
      %p436 = scmp.lt.s32.totalorder %s16, 3
      %s437 = scalar_select %p436, %s16, 3
      %p438 = scmp.lt.s32.totalorder %s435, 15
      %s439 = scalar_select %p438, %s435, 15
      %s440 = smul.addr %s437, 16
      %s441 = sadd.s32 %s439, %s440
      %s442 = smul.addr %s441, 8
      %s443 = scalar_lea.vmem %s1, %s442
      // Predicated region
      $region25: #{tpu_custom_call.1} parent=23 // pred_check
        %p444 = pneg %p72
      $region26: #{tpu_custom_call.1} parent=23 // pred_check_branch
        %446 = sbr.rel (%p444) target = $region28
      $region27: #{tpu_custom_call.1} parent=23 // pred_region
        %s447 = smul.u32 16, %s17
      $region28: #{tpu_custom_call.1} parent=23 // pred_fallthru
        _
    $region24: #{tpu_custom_call.1} parent=5 // pred_fallthru
      _
    %p448 = scmp.le.s32.totalorder 2, %s7
    // Predicated region
    $region29: #{tpu_custom_call.1} parent=5 // pred_check
      %p449 = pneg %p448
    $region30: #{tpu_custom_call.1} parent=5 // pred_check_branch
      %451 = sbr.rel (%p449) target = $region32
    $region31: #{tpu_custom_call.1} parent=5 // pred_region
      %s452 = ssub.s32 %s7, 2
      // Predicated region
      $region33: #{tpu_custom_call.1} parent=31 // pred_check
        %p453 = pneg %p78
      $region34: #{tpu_custom_call.1} parent=31 // pred_check_branch
        %455 = sbr.rel (%p453) target = $region36
      $region35: #{tpu_custom_call.1} parent=31 // pred_region
        %s456 = smul.u32 16, %s19
        %p457 = scmp.lt.s32.totalorder %s18, 3
        %s458 = scalar_select %p457, %s18, 3
        %p459 = scmp.lt.s32.totalorder %s456, 15
        %s460 = scalar_select %p459, %s456, 15
        %s461 = smul.addr %s458, 16
        %s462 = sadd.s32 %s460, %s461
        %s463 = smul.addr %s462, 8
        %s464 = scalar_lea.vmem %s1, %s463
      $region36: #{tpu_custom_call.1} parent=31 // pred_fallthru
        _
    $region32: #{tpu_custom_call.1} parent=5 // pred_fallthru
      _
  $region6: #{tpu_custom_call.1} parent=0 // loop_footer
    %s11 = sadd.s32 1, %s7
  $region7: #{tpu_custom_call.1} parent=0 // loop_footer_branch
    %6 = sbr.rel target = $region3
  $region8: #{tpu_custom_call.1} parent=0 // loop_exit
    _

</llo_original>
